<compile_context>
chip_gen: v6e
topology: v6e:2x2x1
jax: 0.10.0
libtpu: 0.0.40
codegen_flags: <defaults>
</compile_context>

<pallas_src>
import functools

import jax
import jax.numpy as jnp
import numpy as np
from jax.experimental import pallas as pl
from jax.experimental.pallas import tpu as pltpu


def _ls_ce_kernel(logits_ref, label_ref, out_ref,
                  *, lb_smooth, ignore_index, hw_valid, mask_edge):
    j = pl.program_id(0)                       # spatial tile index (parallel)

    x = logits_ref[0].astype(jnp.float32)      # (C, TL)  classes on sublanes
    lab = label_ref[0]                         # (1, TL)  int32

    num_classes, tl = x.shape

    not_ignored = lab != ignore_index                                    # (1, TL)
    if mask_edge:
        col = jax.lax.broadcasted_iota(jnp.int32, (1, tl), 1) + j * tl
        valid = jnp.logical_and(col < hw_valid, not_ignored)
    else:
        valid = not_ignored
    lab_safe = jnp.where(valid, lab, 0)

    # Numerically-stable log-softmax pieces along the class (sublane) axis.
    # All reductions here are per-lane, so garbage in masked-out lanes stays put.
    m = jnp.max(x, axis=0, keepdims=True)                                # (1, TL)
    z = x - m                                                            # (C, TL)
    lse = jnp.log(jnp.sum(jnp.exp(z), axis=0, keepdims=True))            # (1, TL)

    lb_pos = jnp.float32(1.0 - lb_smooth)
    lb_neg = jnp.float32(lb_smooth / num_classes)
    one_minus_neg = jnp.float32(1.0 - lb_smooth / num_classes)           # sum_c smooth[c]

    cls = jax.lax.broadcasted_iota(jnp.int32, x.shape, 0)                # (C, TL)
    onehot = cls == lab_safe
    w = jnp.where(onehot, lb_pos, lb_neg)                                # (C, TL)
    weighted = jnp.sum(z * w, axis=0, keepdims=True)                     # (1, TL)

    # loss = -sum_c smooth[c] * (z[c] - lse) = -(weighted - (1 - lb_neg) * lse)
    loss = -(weighted - one_minus_neg * lse)                             # (1, TL)
    loss = jnp.where(valid, loss, 0.0)

    loss_sum = jnp.sum(loss)                                             # scalar
    cnt_sum = jnp.sum(valid.astype(jnp.float32))                         # scalar (<= TL)

    # Pack both scalars into one lane-dense (8, 128) block: [0,0]=loss, [0,1]=count.
    sub = jax.lax.broadcasted_iota(jnp.int32, (8, 128), 0)
    lane = jax.lax.broadcasted_iota(jnp.int32, (8, 128), 1)
    packed = jnp.where(jnp.logical_and(sub == 0, lane == 0), loss_sum,
                       jnp.where(jnp.logical_and(sub == 0, lane == 1), cnt_sum, 0.0))
    out_ref[0, 0] = packed


def _choose_tile(num_classes, hw, itemsize):
    # ~4 MiB of actual input-logit bytes per grid step (itemsize-aware: bf16 gets ~2x
    # the lane extent of f32) amortizes the ~0.35 us per-step overhead.
    target_bytes = 4 << 20
    sub_in = 8 if itemsize >= 4 else max(8, 32 // itemsize)   # sublane packing of input dtype
    c_pad = -(-num_classes // sub_in) * sub_in
    hw_pad = -(-hw // 128) * 128
    tl = target_bytes // (c_pad * itemsize)
    tl = min(tl, 32768, hw_pad)
    tl = max(128, (tl // 128) * 128)
    return int(tl)


def label_smooth_softmax_ce(logits, label, *, lb_smooth=0.1, reduction="mean",
                            ignore_index=-100, tl=None):
    """logits: (N, C, H, W) float (f32 or bf16); label: (N, H, W) int -> scalar loss."""
    N, C, H, W = logits.shape
    HW = H * W

    # Free reshapes only — no transpose, no padding copy, bf16 inputs pass through.
    x3 = logits.reshape(N, C, HW)
    lab3 = label.reshape(N, 1, HW).astype(jnp.int32)

    itemsize = jnp.dtype(logits.dtype).itemsize
    if tl is None:
        tl = _choose_tile(C, HW, itemsize)
    n_tiles = (HW + tl - 1) // tl

    kernel = functools.partial(
        _ls_ce_kernel,
        lb_smooth=float(lb_smooth),
        ignore_index=int(ignore_index),
        hw_valid=HW,
        mask_edge=(HW % tl) != 0,
    )

    # VMEM budget: sublane-padded double-buffered input blocks + output blocks +
    # headroom for f32 temporaries (x cast, z, exp(z), weights, products).
    sub_in = 8 if itemsize >= 4 else max(8, 32 // itemsize)
    c_pad_in = -(-C // sub_in) * sub_in
    c_pad_f32 = -(-C // 8) * 8
    vmem_needed = (2 * c_pad_in * tl * itemsize     # double-buffered logits blocks
                   + 2 * 8 * tl * 4                 # double-buffered label blocks
                   + 2 * 8 * 128 * 4                # double-buffered output blocks
                   + 6 * c_pad_f32 * tl * 4)        # f32 temporaries headroom
    # 48 MiB is safe on v7x (64 MiB per TC) and well under v5e/v6e's 128 MiB.
    vmem_limit = int(min(max(vmem_needed, 16 << 20), 48 << 20))

    out = pl.pallas_call(
        kernel,
        out_shape=jax.ShapeDtypeStruct((n_tiles, N, 8, 128), jnp.float32),
        grid_spec=pltpu.PrefetchScalarGridSpec(
            num_scalar_prefetch=0,
            grid=(n_tiles, N),
            in_specs=[pl.BlockSpec((1, C, tl), lambda j, n: (n, 0, j)),
                      pl.BlockSpec((1, 1, tl), lambda j, n: (n, 0, j))],
            out_specs=pl.BlockSpec((1, 1, 8, 128), lambda j, n: (j, n, 0, 0)),
        ),
        compiler_params=pltpu.CompilerParams(
            dimension_semantics=("parallel", "parallel"),
            vmem_limit_bytes=vmem_limit),
    )(x3, lab3)

    loss_sum = jnp.sum(out[:, :, 0, 0])
    # Per-block counts are exact integers stored in f32 (<= TL); sum in int32 for exactness.
    n_valid = jnp.sum(out[:, :, 0, 1].astype(jnp.int32))

    if reduction == "mean":
        # Matches the reference: divides by zero (NaN) if there are no valid pixels.
        return loss_sum / n_valid.astype(jnp.float32)
    if reduction == "sum":
        return loss_sum
    # TODO(synk): reduction='none' (per-pixel (N,H,W) loss map) not implemented; only scalar reductions.
    return loss_sum


def _reference(logits, label, lb_smooth=0.1, ignore_index=-100):
    C = logits.shape[1]
    ignore = label == ignore_index
    n_valid = jnp.sum(jnp.logical_not(ignore))
    lab_safe = jnp.where(ignore, 0, label)
    lb_pos, lb_neg = 1.0 - lb_smooth, lb_smooth / C
    onehot = jax.nn.one_hot(lab_safe, C, axis=1)
    smooth = onehot * lb_pos + (1.0 - onehot) * lb_neg
    logs = jax.nn.log_softmax(logits.astype(jnp.float32), axis=1)
    loss = -jnp.sum(logs * smooth, axis=1)
    loss = jnp.where(ignore, 0.0, loss)
    return jnp.sum(loss) / n_valid


if __name__ == "__main__":
    key = jax.random.PRNGKey(0)
    k1, k2, k3 = jax.random.split(key, 3)

    N, C, H, W = 2, 4, 16, 16
    logits = jax.random.normal(k1, (N, C, H, W), dtype=jnp.float32)
    label = jax.random.randint(k2, (N, H, W), 0, C, dtype=jnp.int32)
    # sprinkle some ignore_index pixels
    ignore_mask = jax.random.uniform(k3, (N, H, W)) < 0.1
    label = jnp.where(ignore_mask, -100, label)

    out = label_smooth_softmax_ce(logits, label, lb_smooth=0.1,
                                  reduction="mean", ignore_index=-100)
    out = jax.block_until_ready(out)

    ref = jax.block_until_ready(_reference(logits, label))
    np.testing.assert_allclose(np.asarray(out), np.asarray(ref),
                               rtol=1e-5, atol=1e-5)
    print("KERNEL_OK")
</pallas_src>

<mosaic_0001>
module attributes {stable_mosaic.version = 11 : i64} {
  func.func @_ls_ce_kernel(%arg0: i32, %arg1: i32, %arg2: memref<1x4x256xf32, #tpu.memory_space<vmem>>, %arg3: memref<1x1x256xi32, #tpu.memory_space<vmem>>, %arg4: memref<1x1x8x128xf32, #tpu.memory_space<vmem>>) attributes {dimension_semantics = [#tpu.dimension_semantics<parallel>, #tpu.dimension_semantics<parallel>], iteration_bounds = array<i64: 1, 2>, scalar_prefetch = 0 : i64, scratch_operands = 0 : i64, tpu.core_type = #tpu.core_type<tc>, window_params = [{transform_indices = @transform_0, window_bounds = array<i64: 1, 4, 256>}, {transform_indices = @transform_1, window_bounds = array<i64: 1, 1, 256>}, {transform_indices = @transform_2, window_bounds = array<i64: 1, 1, 8, 128>}]} {
    %c0 = arith.constant 0 : index
    %c0_0 = arith.constant 0 : index
    %c0_1 = arith.constant 0 : index
    %0 = vector.load %arg2[%c0, %c0_0, %c0_1] : memref<1x4x256xf32, #tpu.memory_space<vmem>>, vector<1x4x256xf32>
    %1 = vector.shape_cast %0 : vector<1x4x256xf32> to vector<4x256xf32>
    %c0_2 = arith.constant 0 : index
    %c0_3 = arith.constant 0 : index
    %c0_4 = arith.constant 0 : index
    %2 = vector.load %arg3[%c0_2, %c0_3, %c0_4] : memref<1x1x256xi32, #tpu.memory_space<vmem>>, vector<1x1x256xi32>
    %3 = vector.shape_cast %2 : vector<1x1x256xi32> to vector<1x256xi32>
    %c-100_i32 = arith.constant -100 : i32
    %4 = vector.broadcast %c-100_i32 : i32 to vector<1x256xi32>
    %5 = arith.cmpi ne, %3, %4 : vector<1x256xi32>
    %c0_i32 = arith.constant 0 : i32
    %6 = vector.broadcast %c0_i32 : i32 to vector<1x256xi32>
    %7 = arith.select %5, %3, %6 : vector<1x256xi1>, vector<1x256xi32>
    %cst = arith.constant dense<0xFF800000> : vector<256xf32>
    %8 = vector.multi_reduction <maximumf>, %1, %cst [0] : vector<4x256xf32> to vector<256xf32>
    %9 = vector.shape_cast %8 : vector<256xf32> to vector<1x256xf32>
    %10 = vector.broadcast %9 : vector<1x256xf32> to vector<4x256xf32>
    %11 = arith.subf %1, %10 : vector<4x256xf32>
    %12 = math.exp %11 : vector<4x256xf32>
    %cst_5 = arith.constant dense<0.000000e+00> : vector<256xf32>
    %13 = vector.multi_reduction <add>, %12, %cst_5 [0] : vector<4x256xf32> to vector<256xf32>
    %14 = vector.shape_cast %13 : vector<256xf32> to vector<1x256xf32>
    %15 = math.log %14 : vector<1x256xf32>
    %16 = tpu.iota {dimensions = array<i32: 0>} : vector<4x256xi32>
    %17 = vector.broadcast %7 : vector<1x256xi32> to vector<4x256xi32>
    %18 = arith.cmpi eq, %16, %17 : vector<4x256xi32>
    %cst_6 = arith.constant 0.899999976 : f32
    %cst_7 = arith.constant 2.500000e-02 : f32
    %19 = vector.broadcast %cst_6 : f32 to vector<4x256xf32>
    %20 = vector.broadcast %cst_7 : f32 to vector<4x256xf32>
    %21 = arith.select %18, %19, %20 : vector<4x256xi1>, vector<4x256xf32>
    %22 = arith.mulf %11, %21 : vector<4x256xf32>
    %cst_8 = arith.constant dense<0.000000e+00> : vector<256xf32>
    %23 = vector.multi_reduction <add>, %22, %cst_8 [0] : vector<4x256xf32> to vector<256xf32>
    %24 = vector.shape_cast %23 : vector<256xf32> to vector<1x256xf32>
    %cst_9 = arith.constant 9.750000e-01 : f32
    %25 = vector.broadcast %cst_9 : f32 to vector<1x256xf32>
    %26 = arith.mulf %25, %15 : vector<1x256xf32>
    %27 = arith.subf %24, %26 : vector<1x256xf32>
    %cst_10 = arith.constant 0.000000e+00 : f32
    %28 = vector.broadcast %cst_10 : f32 to vector<1x256xf32>
    %29 = arith.subf %28, %27 : vector<1x256xf32>
    %cst_11 = arith.constant 0.000000e+00 : f32
    %30 = vector.broadcast %cst_11 : f32 to vector<1x256xf32>
    %31 = arith.select %5, %29, %30 : vector<1x256xi1>, vector<1x256xf32>
    %32 = vector.shape_cast %31 : vector<1x256xf32> to vector<1x1x256xf32>
    %cst_12 = arith.constant dense<0.000000e+00> : vector<1xf32>
    %33 = vector.multi_reduction <add>, %32, %cst_12 [1, 2] : vector<1x1x256xf32> to vector<1xf32>
    %34 = vector.shape_cast %33 : vector<1xf32> to vector<1x1x1xf32>
    %35 = vector.extract %34[0, 0, 0] : f32 from vector<1x1x1xf32>
    %36 = arith.extui %5 : vector<1x256xi1> to vector<1x256xi32>
    %37 = arith.sitofp %36 : vector<1x256xi32> to vector<1x256xf32>
    %38 = vector.shape_cast %37 : vector<1x256xf32> to vector<1x1x256xf32>
    %cst_13 = arith.constant dense<0.000000e+00> : vector<1xf32>
    %39 = vector.multi_reduction <add>, %38, %cst_13 [1, 2] : vector<1x1x256xf32> to vector<1xf32>
    %40 = vector.shape_cast %39 : vector<1xf32> to vector<1x1x1xf32>
    %41 = vector.extract %40[0, 0, 0] : f32 from vector<1x1x1xf32>
    %42 = tpu.iota {dimensions = array<i32: 0>} : vector<8x128xi32>
    %43 = tpu.iota {dimensions = array<i32: 1>} : vector<8x128xi32>
    %c0_i32_14 = arith.constant 0 : i32
    %44 = vector.broadcast %c0_i32_14 : i32 to vector<8x128xi32>
    %45 = arith.cmpi eq, %42, %44 : vector<8x128xi32>
    %c0_i32_15 = arith.constant 0 : i32
    %46 = vector.broadcast %c0_i32_15 : i32 to vector<8x128xi32>
    %47 = arith.cmpi eq, %43, %46 : vector<8x128xi32>
    %48 = arith.andi %45, %47 : vector<8x128xi1>
    %c0_i32_16 = arith.constant 0 : i32
    %49 = vector.broadcast %c0_i32_16 : i32 to vector<8x128xi32>
    %50 = arith.cmpi eq, %42, %49 : vector<8x128xi32>
    %c1_i32 = arith.constant 1 : i32
    %51 = vector.broadcast %c1_i32 : i32 to vector<8x128xi32>
    %52 = arith.cmpi eq, %43, %51 : vector<8x128xi32>
    %53 = arith.andi %50, %52 : vector<8x128xi1>
    %cst_17 = arith.constant 0.000000e+00 : f32
    %54 = vector.broadcast %41 : f32 to vector<8x128xf32>
    %55 = vector.broadcast %cst_17 : f32 to vector<8x128xf32>
    %56 = arith.select %53, %54, %55 : vector<8x128xi1>, vector<8x128xf32>
    %57 = vector.broadcast %35 : f32 to vector<8x128xf32>
    %58 = arith.select %48, %57, %56 : vector<8x128xi1>, vector<8x128xf32>
    %c0_18 = arith.constant 0 : index
    %c0_19 = arith.constant 0 : index
    %c0_20 = arith.constant 0 : index
    %c0_21 = arith.constant 0 : index
    %59 = vector.load %arg4[%c0_18, %c0_19, %c0_20, %c0_21] : memref<1x1x8x128xf32, #tpu.memory_space<vmem>>, vector<1x1x8x128xf32>
    %60 = vector.shape_cast %59 : vector<1x1x8x128xf32> to vector<8x128xf32>
    %61 = vector.shape_cast %58 : vector<8x128xf32> to vector<1x1x8x128xf32>
    tpu.vector_store %arg4[%c0_18, %c0_19, %c0_20, %c0_21], %61 {strides = array<i32>} : memref<1x1x8x128xf32, #tpu.memory_space<vmem>>, vector<1x1x8x128xf32>,
    return
  }
  func.func @transform_0(%arg0: i32, %arg1: i32) -> (i32, i32, i32) {
    %c0_i32 = arith.constant 0 : i32
    %c0_i32_0 = arith.constant 0 : i32
    return %arg1, %c0_i32, %arg0 : i32, i32, i32
  }
  func.func @transform_1(%arg0: i32, %arg1: i32) -> (i32, i32, i32) {
    %c0_i32 = arith.constant 0 : i32
    %c0_i32_0 = arith.constant 0 : i32
    return %arg1, %c0_i32, %arg0 : i32, i32, i32
  }
  func.func @transform_2(%arg0: i32, %arg1: i32) -> (i32, i32, i32, i32) {
    %c0_i32 = arith.constant 0 : i32
    %c0_i32_0 = arith.constant 0 : i32
    %c0_i32_1 = arith.constant 0 : i32
    return %arg0, %arg1, %c0_i32, %c0_i32_0 : i32, i32, i32, i32
  }
}

</mosaic_0001>

<llo_original>
// kernel: tpu_custom_call.1
$region0: #{tpu_custom_call.1}
  #allocation0 [shape = 'u32[]', space=smem, size = 0x4, offset = 0x4, fixed_abs, tag = 'smem constant byte address 0x4 - core index']
  #allocation1 [shape = 'u32[144,128]{1,0:T(1,128)}', space=vmem, size = 0x12000, scoped, tag = 'internal scratch']
  %s0 = inlined_call_operand.hbm [shape: f32[2,4,256], index: 0, kind: input, shape index: {}]
  %s1 = inlined_call_operand.hbm [shape: s32[2,1,256], index: 1, kind: input, shape index: {}]
  %s2 = inlined_call_operand.hbm [shape: f32[1,2,8,128], index: 2, kind: output, shape index: {}]
  %s3 = sld [smem:[#allocation0]]
  $region49: #{tpu_custom_call.1} parent=0
    _
  %s5 = ssub.s32 1, %s3
  %s6 = scalar_select 0, %s5, %s3
  $region1: #{tpu_custom_call.1} parent=0
    #allocation2 [shape = 'u8[8192]{0}', space=vmem, size = 0x2000, scoped, tag = 'input window, operand 0']
    #allocation3 [shape = 's32[2]{0}', space=sflag, size = 0x8, scoped, tag = 'scoped memory for tpu_custom_call.1']
    #allocation4 [shape = 's32[2]{0}', space=sflag, size = 0x8, scoped, tag = 'scoped memory for tpu_custom_call.1']
    #allocation5 [shape = 'u8[2048]{0}', space=vmem, size = 0x800, scoped, tag = 'input window, operand 1']
    #allocation6 [shape = 's32[2]{0}', space=sflag, size = 0x8, scoped, tag = 'scoped memory for tpu_custom_call.1']
    #allocation7 [shape = 'u8[8192]{0}', space=vmem, size = 0x2000, scoped, tag = 'output window, operand 0']
    %7 = vsyncpa [#allocation3], 0
    %s8 = scalar_lea.sflag [#allocation3], 1
    %9 = vsyncpa %s8, 0
    %10 = vsyncpa [#allocation6], 0
    %s11 = scalar_lea.sflag [#allocation6], 1
    %12 = vsyncpa %s11, 0
    %13 = vsyncpa [#allocation4], 0
    %s14 = scalar_lea.sflag [#allocation4], 1
    %15 = vsyncpa %s14, 0
    loop: start=0, step=1, limit=4
    $region2: #{tpu_custom_call.1} parent=1 // loop_pre_header
      _
    $region3: #{tpu_custom_call.1} parent=1 // loop_header
      %s17 = sphi 0, %s21
      %p18 = scmp.ge.s32.totalorder %s17, 4
      %s24 = sphi 0, %s36
      %s25 = sphi 0, %s32
      %s26 = sphi 0, %s24
      %s27 = sphi 0, %s25
      %s28 = sphi 0, %s26
      %s29 = sphi 0, %s27
      %s41 = sphi 0, %s43
      %s44 = sphi 0, %s41
      %s45 = sphi 0, %s44
      %s61 = sphi 0, %s45
      %s69 = sphi 0, %s71
      %s72 = sphi 0, %s69
      %s73 = sphi 0, %s72
      %s89 = sphi 0, %s73
      %s97 = sphi 0, %s99
      %s100 = sphi 0, %s97
      %s101 = sphi 0, %s100
      %s117 = sphi 0, %s101
    $region4: #{tpu_custom_call.1} parent=1 // loop_header_branch
      %20 = sbr.rel (%p18) target = $region8
    $region5: #{tpu_custom_call.1} parent=1 // loop_body
      %s22 = ssub.s32 %s17, 1
      %s23 = ssub.s32 %s17, 2
      %s30 = sadd.s32 1, %s25
      %p31 = scmp.ge.s32.totalorder %s30, 2
      %s32 = scalar_select %p31, 0, %s30
      %s33 = sadd.s32 1, %s24
      %s34 = scalar_select %p31, %s33, %s24
      %p35 = scmp.ge.s32.totalorder %s34, 1
      %s36 = scalar_select %p35, 0, %s34
      %s37 = ssub.s32 %s25, %s32
      %s38 = ssub.s32 %s24, %s36
      %s39 = sor.u32 %s37, %s38
      %p40 = scmp.eq.s32.totalorder %s39, 0
      %s42 = sadd.s32 %s41, 1
      %s43 = scalar_select %p40, %s41, %s42
      %p46 = pneg %p40
      %p47 = scmp.eq.s32.totalorder %s17, 1
      %p48 = por %p46, %p47
      %p49 = scmp.ne.s32.totalorder %s41, %s44
      %p50 = scmp.eq.s32.totalorder %s17, 0
      %p51 = por %p49, %p50
      %p52 = scmp.ne.s32.totalorder %s41, %s44
      %p53 = scmp.eq.s32.totalorder %s22, 1
      %p54 = por %p52, %p53
      %p55 = scmp.ne.s32.totalorder %s44, %s45
      %p56 = scmp.eq.s32.totalorder %s22, 0
      %p57 = por %p55, %p56
      %p58 = scmp.ne.s32.totalorder %s44, %s45
      %p59 = scmp.eq.s32.totalorder %s23, 1
      %p60 = por %p58, %p59
      %p62 = scmp.ne.s32.totalorder %s45, %s61
      %p63 = scmp.eq.s32.totalorder %s23, 0
      %p64 = por %p62, %p63
      %s65 = ssub.s32 %s25, %s32
      %s66 = ssub.s32 %s24, %s36
      %s67 = sor.u32 %s65, %s66
      %p68 = scmp.eq.s32.totalorder %s67, 0
      %s70 = sadd.s32 %s69, 1
      %s71 = scalar_select %p68, %s69, %s70
      %p74 = pneg %p68
      %p75 = scmp.eq.s32.totalorder %s17, 1
      %p76 = por %p74, %p75
      %p77 = scmp.ne.s32.totalorder %s69, %s72
      %p78 = scmp.eq.s32.totalorder %s17, 0
      %p79 = por %p77, %p78
      %p80 = scmp.ne.s32.totalorder %s69, %s72
      %p81 = scmp.eq.s32.totalorder %s22, 1
      %p82 = por %p80, %p81
      %p83 = scmp.ne.s32.totalorder %s72, %s73
      %p84 = scmp.eq.s32.totalorder %s22, 0
      %p85 = por %p83, %p84
      %p86 = scmp.ne.s32.totalorder %s72, %s73
      %p87 = scmp.eq.s32.totalorder %s23, 1
      %p88 = por %p86, %p87
      %p90 = scmp.ne.s32.totalorder %s73, %s89
      %p91 = scmp.eq.s32.totalorder %s23, 0
      %p92 = por %p90, %p91
      %s93 = ssub.s32 %s24, %s36
      %s94 = ssub.s32 %s25, %s32
      %s95 = sor.u32 %s93, %s94
      %p96 = scmp.eq.s32.totalorder %s95, 0
      %s98 = sadd.s32 %s97, 1
      %s99 = scalar_select %p96, %s97, %s98
      %p102 = pneg %p96
      %p103 = scmp.eq.s32.totalorder %s17, 1
      %p104 = por %p102, %p103
      %p105 = scmp.ne.s32.totalorder %s97, %s100
      %p106 = scmp.eq.s32.totalorder %s17, 0
      %p107 = por %p105, %p106
      %p108 = scmp.ne.s32.totalorder %s97, %s100
      %p109 = scmp.eq.s32.totalorder %s22, 1
      %p110 = por %p108, %p109
      %p111 = scmp.ne.s32.totalorder %s100, %s101
      %p112 = scmp.eq.s32.totalorder %s22, 0
      %p113 = por %p111, %p112
      %p114 = scmp.ne.s32.totalorder %s100, %s101
      %p115 = scmp.eq.s32.totalorder %s23, 1
      %p116 = por %p114, %p115
      %p118 = scmp.ne.s32.totalorder %s101, %s117
      %p119 = scmp.eq.s32.totalorder %s23, 0
      %p120 = por %p118, %p119
      %p121 = scmp.le.s32.totalorder 1, %s17
      %p122 = scmp.lt.s32.totalorder %s17, 3
      %p123 = pnand %p121, %p122
      %p124 = pneg %p123
      // Predicated region
      $region9: #{tpu_custom_call.1} parent=5 // pred_check
        _
      $region10: #{tpu_custom_call.1} parent=5 // pred_check_branch
        %126 = sbr.rel (%p123) target = $region12
      $region11: #{tpu_custom_call.1} parent=5 // pred_region
        %s127 = ssub.s32 %s17, 1
      $region12: #{tpu_custom_call.1} parent=5 // pred_fallthru
        _
      %p128 = scmp.lt.s32.totalorder %s17, 2
      // Predicated region
      $region13: #{tpu_custom_call.1} parent=5 // pred_check
        %p129 = pneg %p128
      $region14: #{tpu_custom_call.1} parent=5 // pred_check_branch
        %131 = sbr.rel (%p129) target = $region16
      $region15: #{tpu_custom_call.1} parent=5 // pred_region
        // Predicated region
        $region17: #{tpu_custom_call.1} parent=15 // pred_check
          %p132 = pneg %p51
        $region18: #{tpu_custom_call.1} parent=15 // pred_check_branch
          %134 = sbr.rel (%p132) target = $region20
        $region19: #{tpu_custom_call.1} parent=15 // pred_region
          %s135 = sand.u32 %s41, 1
          %s136 = scalar_lea.sflag [#allocation3], %s135
          %s137 = sand.u32 %s41, 1
          %s138 = smul.addr %s137, 8
          %s139 = scalar_lea.vmem [#allocation2], %s138
          %s140 = smul.u32 2, %s24
          %s142 = ssub.s32 128, 128
          %143 = vsyncadd %s136, %s142
          %s144 = smul.addr %s25, 2
          %s145 = sadd.s32 %s140, %s144
          %s146 = smul.addr %s145, 64
          %s147 = scalar_lea.hbm %s0, %s146
          %s149 = sshll.u32 %s139, 4
          %s150 = int_to_ptr.vmem [resolvable:$true] %s149
          %152 = dma.hbm_to_vmem [thread:$0]  %s147, 128, %s150, %s136
        $region20: #{tpu_custom_call.1} parent=15 // pred_fallthru
          _
        // Predicated region
        $region21: #{tpu_custom_call.1} parent=15 // pred_check
          %p153 = pneg %p79
        $region22: #{tpu_custom_call.1} parent=15 // pred_check_branch
          %155 = sbr.rel (%p153) target = $region24
        $region23: #{tpu_custom_call.1} parent=15 // pred_region
          %s156 = sand.u32 %s69, 1
          %s157 = scalar_lea.sflag [#allocation6], %s156
          %s158 = sand.u32 %s69, 1
          %s159 = smul.addr %s158, 2
          %s160 = scalar_lea.vmem [#allocation5], %s159
          %s161 = smul.u32 2, %s24
          %s163 = ssub.s32 32, 32
          %164 = vsyncadd %s157, %s163
          %s165 = smul.addr %s25, 2
          %s166 = sadd.s32 %s161, %s165
          %s167 = smul.addr %s166, 16
          %s168 = scalar_lea.hbm %s1, %s167
          %s170 = sshll.u32 %s160, 4
          %s171 = int_to_ptr.vmem [resolvable:$true] %s170
          %173 = dma.hbm_to_vmem [thread:$0]  %s168, 32, %s171, %s157
        $region24: #{tpu_custom_call.1} parent=15 // pred_fallthru
          _
      $region16: #{tpu_custom_call.1} parent=5 // pred_fallthru
        _
      %p174 = scmp.le.s32.totalorder 1, %s17
      %p175 = scmp.lt.s32.totalorder %s17, 3
      %p176 = pnand %p174, %p175
      %p177 = pneg %p176
      // Predicated region
      $region25: #{tpu_custom_call.1} parent=5 // pred_check
        _
      $region26: #{tpu_custom_call.1} parent=5 // pred_check_branch
        %179 = sbr.rel (%p176) target = $region28
      $region27: #{tpu_custom_call.1} parent=5 // pred_region
        %s180 = ssub.s32 %s17, 1
        %s181 = sand.u32 %s44, 1
        %s182 = scalar_lea.sflag [#allocation3], %s181
        %s183 = sand.u32 %s44, 1
        %s184 = smul.addr %s183, 8
        %s185 = scalar_lea.vmem [#allocation2], %s184
        // Predicated region
        $region29: #{tpu_custom_call.1} parent=27 // pred_check
          %p186 = pneg %p57
        $region30: #{tpu_custom_call.1} parent=27 // pred_check_branch
          %188 = sbr.rel (%p186) target = $region32
        $region31: #{tpu_custom_call.1} parent=27 // pred_region
          %189 = dma.done %s182, 128
        $region32: #{tpu_custom_call.1} parent=27 // pred_fallthru
          _
        %s190 = sand.u32 %s72, 1
        %s191 = scalar_lea.sflag [#allocation6], %s190
        %s192 = sand.u32 %s72, 1
        %s193 = smul.addr %s192, 2
        %s194 = scalar_lea.vmem [#allocation5], %s193
        // Predicated region
        $region33: #{tpu_custom_call.1} parent=27 // pred_check
          %p195 = pneg %p85
        $region34: #{tpu_custom_call.1} parent=27 // pred_check_branch
          %197 = sbr.rel (%p195) target = $region36
        $region35: #{tpu_custom_call.1} parent=27 // pred_region
          %198 = dma.done %s191, 32
        $region36: #{tpu_custom_call.1} parent=27 // pred_fallthru
          _
        %s199 = sand.u32 %s44, 1
        %s200 = scalar_lea.sflag [#allocation3], %s199
        %s201 = sand.u32 %s44, 1
        %s202 = smul.addr %s201, 8
        %s203 = scalar_lea.vmem [#allocation2], %s202
        %p204 = pneg %p57
        %p205 = pneg %p54
        %s206 = sand.u32 %s72, 1
        %s207 = scalar_lea.sflag [#allocation6], %s206
        %s208 = sand.u32 %s72, 1
        %s209 = smul.addr %s208, 2
        %s210 = scalar_lea.vmem [#allocation5], %s209
        %p211 = pneg %p85
        %p212 = pneg %p82
        %p213 = pneg %p113
        %p214 = pneg %p110
        %s215 = sand.u32 %s100, 1
        %s216 = scalar_lea.sflag [#allocation4], %s215
        %s217 = sand.u32 %s100, 1
        %s218 = smul.addr %s217, 8
        %s219 = scalar_lea.vmem [#allocation7], %s218
        %s220 = smul.u32 2, %s26
        %s221 = smul.u32 2, %s26
        %v222 = vld [vmem:[%s185] sm:$0xff]
        %v223 = vld [vmem:[%s194] sm:$0x3]
        %vm224 = vcmp.ne.s32.totalorder %v223, 4294967196
        %v225 = vsel %vm224, %v223, 0
        %v227 = vcombine.high %v222, %v222
        %vm229 = vcmask 1043456
        %v230 = vsel %vm229, %v222, -inf
        %v231 = vrot.slane %v230, 4
        %v232 = vmax.f32 %v230, %v231
        %v233 = vrot.slane %v232, 2
        %v234 = vmax.f32 %v232, %v233
        %v235 = vrot.slane %v234, 1
        %v236 = vmax.f32 %v234, %v235
        %v237 = vsel %vm229, %v227, -inf
        %v238 = vrot.slane %v237, 4
        %v239 = vmax.f32 %v237, %v238
        %v240 = vrot.slane %v239, 2
        %v241 = vmax.f32 %v239, %v240
        %v242 = vrot.slane %v241, 1
        %v243 = vmax.f32 %v241, %v242
        %v246 = vcombine.low %v236, %v243
        %v248 = vsub.f32 %v222, %v246
        %v249 = vmul.f32 %v248, 1.442695
        %v250 = vpow.pop %v249
        %v252 = vcombine.high %v250, %v250
        %v254 = vsel %vm229, %v250, 0.0
        %v255 = vrot.slane %v254, 4
        %v256 = vadd.f32 %v254, %v255
        %v257 = vrot.slane %v256, 2
        %v258 = vadd.f32 %v256, %v257
        %v259 = vrot.slane %v258, 1
        %v260 = vadd.f32 %v258, %v259
        %v261 = vsel %vm229, %v252, 0.0
        %v262 = vrot.slane %v261, 4
        %v263 = vadd.f32 %v261, %v262
        %v264 = vrot.slane %v263, 2
        %v265 = vadd.f32 %v263, %v264
        %v266 = vrot.slane %v265, 1
        %v267 = vadd.f32 %v265, %v266
        %v268 = vlog2.pop %v260
        %v269 = vmul.f32 %v268, 0.6931472
        %v270 = vlog2.pop %v267
        %v271 = vmul.f32 %v270, 0.6931472
        %v272 = vlaneseq
        %v273 = vshrl.u32 %v272, 7
        %v274 = vlaneseq
        %v275 = vshrl.u32 %v274, 7
        %v276 = vsub.s32 0, %v275
        %v277 = vrot.slane %v225, %v276
        %v278 = vlaneseq
        %v279 = vshrl.u32 %v278, 7
        %v280 = vsub.s32 1, %v279
        %v281 = vrot.slane %v225, %v280
        %vm282 = vcmp.eq.s32.totalorder %v273, %v277
        %vm283 = vcmp.eq.s32.totalorder %v273, %v281
        %v284 = vsel %vm282, 0.9, 0.025
        %v285 = vsel %vm283, 0.9, 0.025
        %v288 = vcombine.low %v284, %v285
        %v290 = vmul.f32 %v248, %v288
        %v292 = vcombine.high %v290, %v290
        %v294 = vsel %vm229, %v290, 0.0
        %v295 = vrot.slane %v294, 4
        %v296 = vadd.f32 %v294, %v295
        %v297 = vrot.slane %v296, 2
        %v298 = vadd.f32 %v296, %v297
        %v299 = vrot.slane %v298, 1
        %v300 = vadd.f32 %v298, %v299
        %v301 = vsel %vm229, %v292, 0.0
        %v302 = vrot.slane %v301, 4
        %v303 = vadd.f32 %v301, %v302
        %v304 = vrot.slane %v303, 2
        %v305 = vadd.f32 %v303, %v304
        %v306 = vrot.slane %v305, 1
        %v307 = vadd.f32 %v305, %v306
        %v308 = vmul.f32 %v269, 0.975
        %v309 = vmul.f32 %v271, 0.975
        %v310 = vsub.f32 %v300, %v308
        %v311 = vsub.f32 %v307, %v309
        %v312 = vsub.f32 0.0, %v310
        %v313 = vsub.f32 0.0, %v311
        %v316 = vcombine.low %v312, %v313
        %v318 = vunpack.c.l.s4 1966171168
        %v319 = vunpack.c.0.s8 %v318
        %v320 = vlaneseq
        %v321 = vshrl.u32 %v320, 7
        %v322 = vsub.s32 %v319, %v321
        %v323 = vrot.slane %v316, %v322
        %v325 = vunpack.c.l.s4 1966171168
        %v326 = vunpack.c.0.s8 %v325
        %v327 = vlaneseq
        %v328 = vshrl.u32 %v327, 7
        %v329 = vsub.s32 %v326, %v328
        %v330 = vrot.slane %v323, %v329
        %v332 = vsel %vm224, %v330, 0.0
        %v334 = vlaneseq
        %v335 = vshrl.u32 %v334, 7
        %v336 = vsub.s32 0, %v335
        %v337 = vrot.slane %v332, %v336
        %v338 = vlaneseq
        %v339 = vshrl.u32 %v338, 7
        %v340 = vsub.s32 1, %v339
        %v341 = vrot.slane %v332, %v340
        %vm344 = vcmask 1040384
        %v345 = vsel %vm344, %v337, 0.0
        %v346 = vsel %vm344, %v341, 0.0
        %v347 = vadd.f32 %v345, %v346
        %348 = vadd.xlane.f32.xlu0 %v347
        %v349 = vpop.xlane.xlu0 %348
        %v350 = vrot.slane %v349, 4
        %v351 = vadd.f32 %v349, %v350
        %v352 = vrot.slane %v351, 2
        %v353 = vadd.f32 %v351, %v352
        %v354 = vrot.slane %v353, 1
        %v355 = vadd.f32 %v353, %v354
        %s356 = vtos %v355
        %v357 = vsel %vm224, 1, 0
        %v358 = vcvt.s32.f32 %v357
        %v360 = vlaneseq
        %v361 = vshrl.u32 %v360, 7
        %v362 = vsub.s32 0, %v361
        %v363 = vrot.slane %v358, %v362
        %v364 = vlaneseq
        %v365 = vshrl.u32 %v364, 7
        %v366 = vsub.s32 1, %v365
        %v367 = vrot.slane %v358, %v366
        %v370 = vsel %vm344, %v363, 0.0
        %v371 = vsel %vm344, %v367, 0.0
        %v372 = vadd.f32 %v370, %v371
        %373 = vadd.xlane.f32.xlu0 %v372
        %v374 = vpop.xlane.xlu0 %373
        %v375 = vrot.slane %v374, 4
        %v376 = vadd.f32 %v374, %v375
        %v377 = vrot.slane %v376, 2
        %v378 = vadd.f32 %v376, %v377
        %v379 = vrot.slane %v378, 1
        %v380 = vadd.f32 %v378, %v379
        %s381 = vtos %v380
        %v382 = vlaneseq
        %v383 = vand.u32 %v382, 127
        %vm384 = vcmp.eq.s32.totalorder %v273, 0
        %vm385 = vcmp.eq.s32.totalorder %v383, 0
        %vm386 = vmand %vm384, %vm385
        %vm387 = vcmp.eq.s32.totalorder %v383, 1
        %vm388 = vmand %vm384, %vm387
        %v389 = vstv %s381
        %v390 = vsel %vm388, %v389, 0.0
        %v391 = vstv %s356
        %v392 = vsel %vm386, %v391, %v390
        %393 = vst [vmem:[%s219] sm:$0xff] %v392
        %s394 = sand.u32 %s100, 1
        %s395 = scalar_lea.sflag [#allocation4], %s394
        %s396 = sand.u32 %s100, 1
        %s397 = smul.addr %s396, 8
        %s398 = scalar_lea.vmem [#allocation7], %s397
        // Predicated region
        $region37: #{tpu_custom_call.1} parent=27 // pred_check
          %p399 = pneg %p110
        $region38: #{tpu_custom_call.1} parent=27 // pred_check_branch
          %401 = sbr.rel (%p399) target = $region40
        $region39: #{tpu_custom_call.1} parent=27 // pred_region
          %s403 = ssub.s32 128, 128
          %404 = vsyncadd %s395, %s403
          %s405 = smul.addr %s26, 2
          %s406 = sadd.s32 %s27, %s405
          %s407 = smul.addr %s406, 128
          %s408 = scalar_lea.hbm %s2, %s407
          %s410 = sshll.u32 %s398, 4
          %s411 = int_to_ptr.vmem [resolvable:$true] %s410
          %413 = dma.vmem_to_hbm [thread:$0]  %s411, 128, %s408, %s395
        $region40: #{tpu_custom_call.1} parent=27 // pred_fallthru
          _
      $region28: #{tpu_custom_call.1} parent=5 // pred_fallthru
        _
      %p414 = scmp.le.s32.totalorder 2, %s17
      // Predicated region
      $region41: #{tpu_custom_call.1} parent=5 // pred_check
        %p415 = pneg %p414
      $region42: #{tpu_custom_call.1} parent=5 // pred_check_branch
        %417 = sbr.rel (%p415) target = $region44
      $region43: #{tpu_custom_call.1} parent=5 // pred_region
        %s418 = ssub.s32 %s17, 2
        // Predicated region
        $region45: #{tpu_custom_call.1} parent=43 // pred_check
          %p419 = pneg %p116
        $region46: #{tpu_custom_call.1} parent=43 // pred_check_branch
          %421 = sbr.rel (%p419) target = $region48
        $region47: #{tpu_custom_call.1} parent=43 // pred_region
          %s422 = sand.u32 %s101, 1
          %s423 = scalar_lea.sflag [#allocation4], %s422
          %s424 = sand.u32 %s101, 1
          %s425 = smul.addr %s424, 8
          %s426 = scalar_lea.vmem [#allocation7], %s425
          %427 = dma.done %s423, 128
        $region48: #{tpu_custom_call.1} parent=43 // pred_fallthru
          _
      $region44: #{tpu_custom_call.1} parent=5 // pred_fallthru
        _
    $region6: #{tpu_custom_call.1} parent=1 // loop_footer
      %s21 = sadd.s32 1, %s17
    $region7: #{tpu_custom_call.1} parent=1 // loop_footer_branch
      %16 = sbr.rel target = $region3
    $region8: #{tpu_custom_call.1} parent=1 // loop_exit
      _
    %428 = vsyncpa [#allocation3], 1
    %s429 = scalar_lea.sflag [#allocation3], 1
    %430 = vsyncpa %s429, 1
    %431 = vsyncpa [#allocation6], 1
    %s432 = scalar_lea.sflag [#allocation6], 1
    %433 = vsyncpa %s432, 1
    %434 = vsyncpa [#allocation4], 1
    %s435 = scalar_lea.sflag [#allocation4], 1
    %436 = vsyncpa %s435, 1

</llo_original>
